<compile_context>
chip_gen: v6e
topology: v6e:2x2x1
jax: 0.10.0
libtpu: 0.0.40
codegen_flags: <defaults>
</compile_context>

<pallas_src>
import functools
import math

import jax
import jax.numpy as jnp
from jax.experimental import pallas as pl
from jax.experimental.pallas import tpu as pltpu

_MiB = 1 << 20


def make_positional_encoding_table(max_len: int, d_model: int) -> jnp.ndarray:
    """Deterministic parameter setup, identical math to the PyTorch __init__.

    PyTorch stores pe as [max_len, 1, d_model]; we keep [max_len, d_model]
    (float32) and re-introduce the broadcast (batch) axis inside the kernel.
    """
    position = jnp.arange(max_len, dtype=jnp.float32)[:, None]            # [max_len, 1]
    div_term = jnp.exp(
        jnp.arange(0, d_model, 2, dtype=jnp.float32)
        * (-math.log(10000.0) / d_model)
    )                                                                     # [d_model//2]
    pe = jnp.zeros((max_len, d_model), dtype=jnp.float32)
    pe = pe.at[:, 0::2].set(jnp.sin(position * div_term))
    pe = pe.at[:, 1::2].set(jnp.cos(position * div_term))
    return pe


@functools.lru_cache(maxsize=1)
def _tpu_vmem_and_budget() -> tuple[int, int]:
    """Returns (physical VMEM bytes per TensorCore, target bytes per x block)."""
    kind = ""
    try:
        kind = jax.devices()[0].device_kind.lower()
    except Exception:
        pass
    phys = None
    try:
        phys = int(getattr(pltpu.get_tpu_info(), "vmem_capacity_bytes"))
    except Exception:
        phys = None

    is_v7 = ("v7" in kind) or ("7x" in kind)
    if phys is not None and phys <= 64 * _MiB:
        is_v7 = True
    if phys is None:
        phys = 64 * _MiB if is_v7 else 128 * _MiB
    if is_v7:
        phys = min(phys, 64 * _MiB)          # 64 MiB per TensorCore on v7x

    if is_v7 or "v6" in kind:
        block_budget = 8 * _MiB              # high HBM BW: amortize ~0.35us/step
    elif "v5" in kind:
        block_budget = 4 * _MiB              # v5e: 2-4 MiB blocks already <7% overhead
    else:
        block_budget = 4 * _MiB              # unknown generation: conservative
    return phys, block_budget


def _sublane_multiple(itemsize: int) -> int:
    # f32: 8 rows/vreg, bf16: 16 (packed pairs), int8/fp8: 32.
    return max(8, 32 // max(1, itemsize))


def _choose_tile_s(S: int, B: int, D: int, x_itemsize: int,
                   block_budget: int, vmem_cap: int) -> int:
    """Sequence-tile rows: sublane-multiple, budget-sized, >=2 grid steps if possible."""
    sub = _sublane_multiple(x_itemsize)
    s_pad = -(-S // sub) * sub                       # S rounded up to sublane multiple
    row_x = B * D * x_itemsize                       # one sequence row of x / out
    # Live VMEM per row: 2x-buffered x in + x out, 2x-buffered pe, f32 pe_wide scratch.
    live_per_row = 4 * row_x + 2 * D * 4 + B * D * 4
    rows_by_budget = block_budget // max(1, row_x)
    rows_by_cap = max(1, (vmem_cap - 4 * _MiB) // max(1, live_per_row))
    tile = max(sub, min(rows_by_budget, rows_by_cap) // sub * sub)
    tile = min(tile, s_pad)
    if s_pad >= 2 * sub:
        # Guarantee >= 2 grid steps (v7x shards the "parallel" axis over both
        # TensorCores) and balance the halves when everything fits one block.
        two_step = -(-(s_pad // 2) // sub) * sub
        tile = min(tile, two_step)
    return tile


def positional_encoding_forward(
    x: jnp.ndarray,
    pe_table: jnp.ndarray,
    *,
    dropout_p: float = 0.1,
    training: bool = False,
    seed: int = 0,
    tile_s: int | None = None,
    donate_x: bool = True,
) -> jnp.ndarray:
    """x: [seq_len, batch, d_model] -> same shape/dtype (x + pe, then dropout)."""
    S, B, D = x.shape
    assert pe_table.ndim == 2 and pe_table.shape[0] >= S and pe_table.shape[1] == D
    dtype = x.dtype

    # pe stays float32 (parity with the PyTorch f32 buffer add); the standard
    # table is already f32 so no per-call cast op is launched.
    pe = pe_table if pe_table.dtype == jnp.float32 else pe_table.astype(jnp.float32)
    x2 = x.reshape(S, B * D)                     # contiguous lane-dense 2-D view

    phys_vmem, block_budget = _tpu_vmem_and_budget()
    vmem_cap = max(phys_vmem - 16 * _MiB, 32 * _MiB)   # e.g. 48 MiB headroomed on v7x
    tile = tile_s if tile_s is not None else _choose_tile_s(
        S, B, D, dtype.itemsize, block_budget, vmem_cap)
    grid = (pl.cdiv(S, tile),)                   # ragged last block handled by Pallas

    needed = tile * (4 * B * D * dtype.itemsize + 2 * D * 4 + B * D * 4) + 4 * _MiB
    vmem_limit = int(min(max(needed, 32 * _MiB), max(vmem_cap, needed)))

    apply_dropout = bool(training) and float(dropout_p) > 0.0
    drop_all = float(dropout_p) >= 1.0           # nn.Dropout(p=1.0) zeroes everything
    keep_p = 1.0 - float(dropout_p)
    # Keep probability is (2^32 - thresh) / 2^32, i.e. off from 1-p by < 2^-32.
    thresh = min(int(round(float(dropout_p) * 2.0 ** 32)), 2 ** 32 - 1)

    def kernel(seed_ref, x_ref, pe_ref, o_ref, pe_wide_ref):
        # x_ref / o_ref: (tile, B*D) in x.dtype;  pe_ref: (tile, D) f32;
        # pe_wide_ref: (tile, B*D) f32 VMEM scratch.
        pe_blk = pe_ref[...]
        if B == 1:
            pe_wide = pe_blk
        else:
            # Broadcast pe across the batch once per block with cheap VMEM
            # slice-stores (keeps the HBM pe stream at 1/B of the x stream),
            # so the hot path below is a single full-lane-width op.
            for b in range(B):
                pe_wide_ref[:, pl.ds(b * D, D)] = pe_blk
            pe_wide = pe_wide_ref[...]
        y = x_ref[...].astype(jnp.float32) + pe_wide        # one full-width add
        if apply_dropout:
            if drop_all:
                y = jnp.zeros_like(y)
            else:
                # Reseed per grid step (seed, program_id) => order independent.
                pltpu.prng_seed(seed_ref[0], pl.program_id(0))
                bits = pltpu.bitcast(pltpu.prng_random_bits(y.shape), jnp.uint32)
                keep = bits >= jnp.uint32(thresh)
                y = jnp.where(keep, y * jnp.float32(1.0 / keep_p), jnp.float32(0.0))
        o_ref[...] = y.astype(o_ref.dtype)                   # one contiguous store

    out2 = pl.pallas_call(
        kernel,
        out_shape=jax.ShapeDtypeStruct((S, B * D), dtype),
        grid_spec=pltpu.PrefetchScalarGridSpec(
            num_scalar_prefetch=1,
            grid=grid,
            in_specs=[
                pl.BlockSpec((tile, B * D), lambda i, seed_ref: (i, 0)),
                pl.BlockSpec((tile, D), lambda i, seed_ref: (i, 0)),
            ],
            out_specs=pl.BlockSpec((tile, B * D), lambda i, seed_ref: (i, 0)),
            scratch_shapes=[pltpu.VMEM((tile, B * D), jnp.float32)],
        ),
        compiler_params=pltpu.CompilerParams(
            dimension_semantics=("parallel",),
            vmem_limit_bytes=vmem_limit,
        ),
        # Flattened operand indices include the scalar-prefetch seed:
        # 0=seed, 1=x2, 2=pe.
        input_output_aliases=({1: 0} if donate_x else {}),
    )(jnp.array([seed], dtype=jnp.int32), x2, pe)

    return out2.reshape(S, B, D)


if __name__ == "__main__":
    # Small shapes consistent with the module's forward: [seq_len, batch, d_model]
    SEQ, BATCH, D_MODEL, MAX_LEN = 8, 2, 32, 64

    key = jax.random.PRNGKey(0)
    x = jax.random.normal(key, (SEQ, BATCH, D_MODEL), dtype=jnp.float32)

    pe_table = make_positional_encoding_table(MAX_LEN, D_MODEL)

    # Pure-JAX reference for the eval path (computed before the kernel call).
    ref = x + pe_table[:SEQ][:, None, :]

    # Eval-mode forward (dropout is identity), deterministic.
    out = positional_encoding_forward(x, pe_table, dropout_p=0.1, training=False)
    out = jax.block_until_ready(out)
    assert out.shape == x.shape and out.dtype == x.dtype
    assert jnp.allclose(out, ref, atol=1e-6, rtol=1e-6)

    # The training (dropout) path uses the TPU hardware PRNG (pltpu.prng_*),
    # which has no CPU/interpret lowering -> only exercise it on a TPU backend.
    if jax.default_backend() == "tpu":
        out_train = positional_encoding_forward(
            x, pe_table, dropout_p=0.1, training=True, seed=123
        )
        out_train = jax.block_until_ready(out_train)
        # Dropout output: every element is either 0 or (x+pe)/(1-p).
        scaled = ref / 0.9
        ok = jnp.all(
            jnp.isclose(out_train, 0.0, atol=1e-6)
            | jnp.isclose(out_train, scaled, atol=1e-5)
        )
        assert bool(ok)

    print("KERNEL_OK")
</pallas_src>

<mosaic_0001>
module attributes {stable_mosaic.version = 11 : i64} {
  func.func @kernel(%arg0: i32, %arg1: memref<1xi32, #tpu.memory_space<smem>>, %arg2: memref<8x64xf32, #tpu.memory_space<vmem>>, %arg3: memref<8x32xf32, #tpu.memory_space<vmem>>, %arg4: memref<8x64xf32, #tpu.memory_space<vmem>>, %arg5: memref<8x64xf32, #tpu.memory_space<vmem>>) attributes {dimension_semantics = [#tpu.dimension_semantics<parallel>], iteration_bounds = array<i64: 1>, scalar_prefetch = 1 : i64, scratch_operands = 1 : i64, tpu.core_type = #tpu.core_type<tc>, window_params = [{transform_indices = @transform_0, window_bounds = array<i64: 8, 64>}, {transform_indices = @transform_1, window_bounds = array<i64: 8, 32>}, {transform_indices = @transform_2, window_bounds = array<i64: 8, 64>}]} {
    %c0 = arith.constant 0 : index
    %c0_0 = arith.constant 0 : index
    %0 = vector.load %arg3[%c0, %c0_0] : memref<8x32xf32, #tpu.memory_space<vmem>>, vector<8x32xf32>
    %c0_1 = arith.constant 0 : index
    %c0_2 = arith.constant 0 : index
    %1 = vector.load %arg5[%c0_1, %c0_2] : memref<8x64xf32, #tpu.memory_space<vmem>>, vector<8x32xf32>
    tpu.vector_store %arg5[%c0_1, %c0_2], %0 {strides = array<i32>} : memref<8x64xf32, #tpu.memory_space<vmem>>, vector<8x32xf32>,
    %c0_3 = arith.constant 0 : index
    %c32 = arith.constant 32 : index
    %2 = vector.load %arg5[%c0_3, %c32] : memref<8x64xf32, #tpu.memory_space<vmem>>, vector<8x32xf32>
    tpu.vector_store %arg5[%c0_3, %c32], %0 {strides = array<i32>} : memref<8x64xf32, #tpu.memory_space<vmem>>, vector<8x32xf32>,
    %c0_4 = arith.constant 0 : index
    %c0_5 = arith.constant 0 : index
    %3 = vector.load %arg5[%c0_4, %c0_5] : memref<8x64xf32, #tpu.memory_space<vmem>>, vector<8x64xf32>
    %c0_6 = arith.constant 0 : index
    %c0_7 = arith.constant 0 : index
    %4 = vector.load %arg2[%c0_6, %c0_7] : memref<8x64xf32, #tpu.memory_space<vmem>>, vector<8x64xf32>
    %5 = arith.addf %4, %3 : vector<8x64xf32>
    %c0_8 = arith.constant 0 : index
    %c0_9 = arith.constant 0 : index
    %6 = vector.load %arg4[%c0_8, %c0_9] : memref<8x64xf32, #tpu.memory_space<vmem>>, vector<8x64xf32>
    tpu.vector_store %arg4[%c0_8, %c0_9], %5 {strides = array<i32>} : memref<8x64xf32, #tpu.memory_space<vmem>>, vector<8x64xf32>,
    return
  }
  func.func @transform_0(%arg0: i32, %arg1: memref<1xi32, #tpu.memory_space<smem>>) -> (i32, i32) {
    %c0_i32 = arith.constant 0 : i32
    %c0_i32_0 = arith.constant 0 : i32
    return %arg0, %c0_i32 : i32, i32
  }
  func.func @transform_1(%arg0: i32, %arg1: memref<1xi32, #tpu.memory_space<smem>>) -> (i32, i32) {
    %c0_i32 = arith.constant 0 : i32
    %c0_i32_0 = arith.constant 0 : i32
    return %arg0, %c0_i32 : i32, i32
  }
  func.func @transform_2(%arg0: i32, %arg1: memref<1xi32, #tpu.memory_space<smem>>) -> (i32, i32) {
    %c0_i32 = arith.constant 0 : i32
    %c0_i32_0 = arith.constant 0 : i32
    return %arg0, %c0_i32 : i32, i32
  }
}

</mosaic_0001>

<llo_original>
// kernel: tpu_custom_call.1
$region0: #{tpu_custom_call.1}
  #allocation0 [shape = 'u32[]', space=smem, size = 0x4, offset = 0x4, fixed_abs, tag = 'smem constant byte address 0x4 - core index']
  #allocation1 [shape = 'u32[144,128]{1,0:T(1,128)}', space=vmem, size = 0x12000, scoped, tag = 'internal scratch']
  #allocation2 [shape = 'f32[8,64]{1,0:T(8,128)}', space=vmem, size = 0x1000, scoped, tag = 'scratch operand']
  #allocation3 [shape = 's32[1]{0}', space=sflag, size = 0x4, scoped, tag = 'scoped memory for tpu_custom_call.1']
  #allocation4 [shape = 's32[1]{0:T(128)S(6)}', space=smem, size = 0x200, scoped, tag = 'prefetched SMEM operand 0']
  %s0 = inlined_call_operand.<no memory space> [shape: s32[1], index: 0, kind: input, shape index: {}]
  %s1 = inlined_call_operand.hbm [shape: f32[8,64], index: 1, kind: input, shape index: {}, may-alias: {1,3}]
  %s2 = inlined_call_operand.vmem [shape: f32[64,32], index: 2, kind: input, shape index: {}]
  %s3 = inlined_call_operand.hbm [shape: f32[8,64], index: 3, kind: output, shape index: {}, may-alias: {1,3}]
  %s4 = sld [smem:[#allocation0]]
  $region22: #{tpu_custom_call.1} parent=0
    _
  %s6 = ssub.s32 1, %s4
  %s7 = scalar_select 0, %s6, %s4
  %8 = sst [smem:[#allocation4]] %s0
  $region1: #{tpu_custom_call.1} parent=0
    #allocation5 [shape = 'u8[4096]{0}', space=vmem, size = 0x1000, scoped, tag = 'input window, operand 1, single buffered']
    #allocation6 [shape = 's32[1]{0}', space=sflag, size = 0x4, scoped, tag = 'scoped memory for tpu_custom_call.1']
    #allocation7 [shape = 's32[1]{0}', space=sflag, size = 0x4, scoped, tag = 'scoped memory for tpu_custom_call.1']
    #allocation8 [shape = 'u8[4096]{0}', space=vmem, size = 0x1000, scoped, tag = 'output window, operand 0, single buffered']
    %9 = vsyncpa [#allocation6], 0
    %10 = vsyncpa [#allocation7], 0
    // Predicated region
    $region2: #{tpu_custom_call.1} parent=1 // pred_check
      _
    $region3: #{tpu_custom_call.1} parent=1 // pred_check_branch
      %12 = sbr.rel (0) target = $region5
    $region4: #{tpu_custom_call.1} parent=1 // pred_region
      %s14 = ssub.s32 128, 128
      %15 = vsyncadd [#allocation6], %s14
      %s17 = sshll.u32 [#allocation5], 4
      %s18 = int_to_ptr.vmem [resolvable:$true] %s17
      %20 = dma.hbm_to_vmem [thread:$0]  %s1, 128, %s18, [#allocation6]
    $region5: #{tpu_custom_call.1} parent=1 // pred_fallthru
      _
    // Predicated region
    $region6: #{tpu_custom_call.1} parent=1 // pred_check
      _
    $region7: #{tpu_custom_call.1} parent=1 // pred_check_branch
      %22 = sbr.rel (0) target = $region9
    $region8: #{tpu_custom_call.1} parent=1 // pred_region
      _
    $region9: #{tpu_custom_call.1} parent=1 // pred_fallthru
      _
    // Predicated region
    $region10: #{tpu_custom_call.1} parent=1 // pred_check
      _
    $region11: #{tpu_custom_call.1} parent=1 // pred_check_branch
      %24 = sbr.rel (0) target = $region13
    $region12: #{tpu_custom_call.1} parent=1 // pred_region
      %25 = dma.done [#allocation6], 128
    $region13: #{tpu_custom_call.1} parent=1 // pred_fallthru
      _
    %v26 = vld [vmem:[%s2] sm:$0xff]
    %vm27 = vcmask 261120
    %28 = vst.msk [vmem:[#allocation2] sm:$0xff] %vm27, %v26
    %30 = vrot.lane.b32.xlu0 %v26, 32
    %v31 = vpop.permute.xlu0 %30
    %vm33 = vcmask 523520
    %34 = vst.msk [vmem:[#allocation2] sm:$0xff] %vm33, %v31
    %v35 = vld [vmem:[#allocation2] sm:$0xff]
    %v36 = vld [vmem:[#allocation5] sm:$0xff]
    %v37 = vadd.f32 %v36, %v35
    %vm38 = vcmask 523264
    %39 = vst.msk [vmem:[#allocation8] sm:$0xff] %vm38, %v37
    // Predicated region
    $region14: #{tpu_custom_call.1} parent=1 // pred_check
      _
    $region15: #{tpu_custom_call.1} parent=1 // pred_check_branch
      %41 = sbr.rel (0) target = $region17
    $region16: #{tpu_custom_call.1} parent=1 // pred_region
      %s43 = ssub.s32 128, 128
      %44 = vsyncadd [#allocation7], %s43
      %s46 = sshll.u32 [#allocation8], 4
      %s47 = int_to_ptr.vmem [resolvable:$true] %s46
      %49 = dma.vmem_to_hbm [thread:$0]  %s47, 128, %s3, [#allocation7]
    $region17: #{tpu_custom_call.1} parent=1 // pred_fallthru
      _
    // Predicated region
    $region18: #{tpu_custom_call.1} parent=1 // pred_check
      _
    $region19: #{tpu_custom_call.1} parent=1 // pred_check_branch
      %51 = sbr.rel (0) target = $region21
    $region20: #{tpu_custom_call.1} parent=1 // pred_region
      %52 = dma.done [#allocation7], 128
    $region21: #{tpu_custom_call.1} parent=1 // pred_fallthru
      _
    %53 = vsyncpa [#allocation6], 1
    %54 = vsyncpa [#allocation7], 1

</llo_original>
